<compile_context>
chip_gen: v7x
topology: tpu7x:2x2x1
jax: 0.10.0
libtpu: 0.0.40
codegen_flags: <defaults>
</compile_context>

<pallas_src>
import functools
import math

import jax
import jax.numpy as jnp
from jax.experimental import pallas as pl
from jax.experimental.pallas import tpu as pltpu

EPS = 1e-5
_VMEM_LIMIT_BYTES = 48 * 1024 * 1024  # <= v7x 64 MiB with headroom


def _mxu_tile():
    """Row-tile target: 128 on v5-class chips (128x128 MXU), 256 on v6e/v7x."""
    try:
        info = pltpu.get_tpu_info()
        name = str(getattr(info, "chip_version", "")).lower()
        if "v3" in name or "v4" in name or "v5" in name:
            return 128
    except Exception:
        pass
    return 256


_TM = _mxu_tile()   # row (sublane) tile target
_TF = 512           # ff_dim reduction tile target (lane aligned)


def _tile(dim, target, align):
    """Largest divisor of `dim` that is <= target and a multiple of `align`.

    Never returns a non-divisor (grids stay exact); falls back to the whole dim
    only if no aligned divisor exists.
    """
    if dim <= target:
        return dim
    c = (target // align) * align
    while c >= align:
        if dim % c == 0:
            return c
        c -= align
    return dim


def _cparams(semantics):
    return pltpu.CompilerParams(dimension_semantics=semantics,
                                vmem_limit_bytes=_VMEM_LIMIT_BYTES)


# ------------------------------------------------------------------ kernels

def _conv1x1_kernel(x_ref, w_ref, b_ref, o_ref):
    """NCHW pointwise conv tile: (C, ts) contracted over C -> (ts, E) bf16."""
    x = x_ref[0].astype(jnp.bfloat16)                                # (C, ts)
    y = jax.lax.dot_general(x, w_ref[...], (((0,), (0,)), ((), ())),
                            preferred_element_type=jnp.float32)       # (ts, E)
    o_ref[0] = (y + b_ref[...]).astype(o_ref.dtype)


def _qkv_proj_kernel(x_ref, w_ref, b_ref, o_ref):
    """Fused per-head Q/K/V projection into a head-major (3, B, H, S, d) layout."""
    x = x_ref[0]                                                     # (ts, E) bf16
    for j in range(3):                                               # q, k, v
        y = jnp.dot(x, w_ref[j, 0], preferred_element_type=jnp.float32)
        o_ref[j, 0, 0] = (y + b_ref[j, 0, 0]).astype(o_ref.dtype)


def _flash_attn_kernel(q_ref, k_ref, v_ref, o_ref, m_sc, l_sc, acc_sc, *, scale):
    """Flash-style attention: grid (B, H, q_tiles, kv_tiles), online softmax."""
    kv = pl.program_id(3)

    @pl.when(kv == 0)
    def _():
        m_sc[...] = jnp.full_like(m_sc, -jnp.inf)
        l_sc[...] = jnp.zeros_like(l_sc)
        acc_sc[...] = jnp.zeros_like(acc_sc)

    q = q_ref[0, 0, 0]                                               # (tq, d) bf16
    k = k_ref[0, 0, 0]                                               # (tk, d) bf16
    v = v_ref[0, 0, 0]                                               # (tk, d) bf16
    s = jax.lax.dot_general(q, k, (((1,), (1,)), ((), ())),
                            preferred_element_type=jnp.float32) * scale   # (tq, tk)
    m_new = jnp.maximum(m_sc[...], jnp.max(s, axis=-1, keepdims=True))
    alpha = jnp.exp(m_sc[...] - m_new)
    p = jnp.exp(s - m_new)
    l_sc[...] = alpha * l_sc[...] + jnp.sum(p, axis=-1, keepdims=True)
    acc_sc[...] = alpha * acc_sc[...] + jnp.dot(p.astype(jnp.bfloat16), v,
                                                preferred_element_type=jnp.float32)
    m_sc[...] = m_new

    @pl.when(kv == pl.num_programs(3) - 1)
    def _():
        inv_l = pl.reciprocal(l_sc[...], approx=True)
        o_ref[0, 0] = (acc_sc[...] * inv_l).astype(o_ref.dtype)


def _proj_add_ln_kernel(a_ref, res_ref, wo_ref, bo_ref, g_ref, be_ref,
                        o_ref, acc_ref):
    """Head-reduction out-projection + residual + LayerNorm (post-norm), fused."""
    hh = pl.program_id(1)

    @pl.when(hh == 0)
    def _():
        acc_ref[...] = jnp.zeros_like(acc_ref)

    acc_ref[...] += jnp.dot(a_ref[0, 0], wo_ref[0],
                            preferred_element_type=jnp.float32)

    @pl.when(hh == pl.num_programs(1) - 1)
    def _():
        x = acc_ref[...] + bo_ref[...] + res_ref[...].astype(jnp.float32)
        mean = jnp.mean(x, axis=-1, keepdims=True)
        var = jnp.mean((x - mean) ** 2, axis=-1, keepdims=True)
        y = (x - mean) * jax.lax.rsqrt(var + EPS) * g_ref[...] + be_ref[...]
        o_ref[...] = y.astype(o_ref.dtype)


def _ffn_add_ln_kernel(x_ref, w1_ref, b1_ref, w2_ref, b2_ref, g_ref, be_ref,
                       o_ref, acc_ref):
    """ff_dim-tiled FFN (linear1->relu->linear2 as an F-reduction) + residual + LN."""
    f = pl.program_id(1)

    @pl.when(f == 0)
    def _():
        acc_ref[...] = jnp.zeros_like(acc_ref)

    hdn = jnp.dot(x_ref[...], w1_ref[...], preferred_element_type=jnp.float32)
    hdn = jnp.maximum(hdn + b1_ref[...], 0.0)                        # (tm, tf)
    acc_ref[...] += jnp.dot(hdn.astype(jnp.bfloat16), w2_ref[...],
                            preferred_element_type=jnp.float32)

    @pl.when(f == pl.num_programs(1) - 1)
    def _():
        y = acc_ref[...] + b2_ref[...] + x_ref[...].astype(jnp.float32)
        mean = jnp.mean(y, axis=-1, keepdims=True)
        var = jnp.mean((y - mean) ** 2, axis=-1, keepdims=True)
        y = (y - mean) * jax.lax.rsqrt(var + EPS) * g_ref[...] + be_ref[...]
        o_ref[...] = y.astype(o_ref.dtype)


def _instance_norm_kernel(x_ref, o_ref):
    """InstanceNorm over S, lane-dense (S, te) in/out (transpose handled outside)."""
    x = x_ref[0].astype(jnp.float32)                                 # (S, te)
    mean = jnp.mean(x, axis=0, keepdims=True)
    var = jnp.mean((x - mean) ** 2, axis=0, keepdims=True)
    o_ref[0] = (x - mean) * jax.lax.rsqrt(var + EPS)


# ------------------------------------------------------------------ wrappers

def conv1x1(x, w, b):
    """(B, C, H, W) f32 -> (B, S, E) bf16 pointwise conv, tiled over (B, S)."""
    B, C, Hh, Ww = x.shape
    S = Hh * Ww
    E = w.shape[1]
    ts = _tile(S, 512, 128)
    x3 = x.reshape(B, C, S)                                          # free reshape
    const = lambda b_, s_: (0, 0)
    return pl.pallas_call(
        _conv1x1_kernel,
        out_shape=jax.ShapeDtypeStruct((B, S, E), jnp.bfloat16),
        grid_spec=pltpu.PrefetchScalarGridSpec(
            num_scalar_prefetch=0, grid=(B, S // ts),
            in_specs=[pl.BlockSpec((1, C, ts), lambda b_, s_: (b_, 0, s_)),
                      pl.BlockSpec((C, E), const),
                      pl.BlockSpec((1, E), const)],
            out_specs=pl.BlockSpec((1, ts, E), lambda b_, s_: (b_, s_, 0))),
        compiler_params=_cparams(("parallel", "parallel")),
    )(x3, w, b)


def qkv_projection(h, w_qkv, b_qkv, B, S):
    """h (M, E) bf16 -> head-major (3, B, H, S, d) bf16 (fused Q/K/V projection)."""
    M, E = h.shape
    _, Hn, _, d = w_qkv.shape
    ts = _tile(S, _TM, 8)
    x3 = h.reshape(B, S, E)                                          # free reshape
    return pl.pallas_call(
        _qkv_proj_kernel,
        out_shape=jax.ShapeDtypeStruct((3, B, Hn, S, d), jnp.bfloat16),
        grid_spec=pltpu.PrefetchScalarGridSpec(
            num_scalar_prefetch=0, grid=(B, S // ts, Hn),
            in_specs=[pl.BlockSpec((1, ts, E), lambda b, s, hh: (b, s, 0)),
                      pl.BlockSpec((3, 1, E, d), lambda b, s, hh: (0, hh, 0, 0)),
                      pl.BlockSpec((3, 1, 1, d), lambda b, s, hh: (0, hh, 0, 0))],
            out_specs=pl.BlockSpec((3, 1, 1, ts, d),
                                   lambda b, s, hh: (0, b, hh, s, 0))),
        compiler_params=_cparams(("parallel", "parallel", "parallel")),
    )(x3, w_qkv, b_qkv)


def attention(qkv, B, S):
    """Flash attention over head-major Q/K/V: (3,B,H,S,d) -> (B,H,S,d) bf16."""
    _, _, Hn, _, d = qkv.shape
    tq = _tile(S, _TM, 8)
    tk = _tile(S, _TM, 8)
    scale = 1.0 / math.sqrt(d)
    q_spec = pl.BlockSpec((1, 1, 1, tq, d), lambda b, hh, sq, kv: (0, b, hh, sq, 0))
    k_spec = pl.BlockSpec((1, 1, 1, tk, d), lambda b, hh, sq, kv: (1, b, hh, kv, 0))
    v_spec = pl.BlockSpec((1, 1, 1, tk, d), lambda b, hh, sq, kv: (2, b, hh, kv, 0))
    return pl.pallas_call(
        functools.partial(_flash_attn_kernel, scale=scale),
        out_shape=jax.ShapeDtypeStruct((B, Hn, S, d), jnp.bfloat16),
        grid_spec=pltpu.PrefetchScalarGridSpec(
            num_scalar_prefetch=0, grid=(B, Hn, S // tq, S // tk),
            in_specs=[q_spec, k_spec, v_spec],
            out_specs=pl.BlockSpec((1, 1, tq, d),
                                   lambda b, hh, sq, kv: (b, hh, sq, 0)),
            scratch_shapes=[pltpu.VMEM((tq, 1), jnp.float32),
                            pltpu.VMEM((tq, 1), jnp.float32),
                            pltpu.VMEM((tq, d), jnp.float32)]),
        compiler_params=_cparams(("parallel", "parallel", "parallel", "arbitrary")),
    )(qkv, qkv, qkv)


def proj_add_layernorm(a, res, wo, bo, g, be, B, S):
    """Head-reduction out-proj + residual + LayerNorm1: -> (M, E) bf16."""
    Hn, d, E = wo.shape
    M = res.shape[0]
    tm = _tile(S, _TM, 8)
    nsb = S // tm
    const = lambda i, hh: (0, 0)
    return pl.pallas_call(
        _proj_add_ln_kernel,
        out_shape=jax.ShapeDtypeStruct((M, E), jnp.bfloat16),
        grid_spec=pltpu.PrefetchScalarGridSpec(
            num_scalar_prefetch=0, grid=(M // tm, Hn),
            in_specs=[pl.BlockSpec((1, 1, tm, d),
                                   lambda i, hh: (i // nsb, hh, i % nsb, 0)),
                      pl.BlockSpec((tm, E), lambda i, hh: (i, 0)),
                      pl.BlockSpec((1, d, E), lambda i, hh: (hh, 0, 0)),
                      pl.BlockSpec((1, E), const),
                      pl.BlockSpec((1, E), const),
                      pl.BlockSpec((1, E), const)],
            out_specs=pl.BlockSpec((tm, E), lambda i, hh: (i, 0)),
            scratch_shapes=[pltpu.VMEM((tm, E), jnp.float32)]),
        compiler_params=_cparams(("parallel", "arbitrary")),
    )(a, res, wo, bo, g, be)


def ffn_add_layernorm(x, w1, b1, w2, b2, g, be, S):
    """ff_dim-tiled FFN + residual + LayerNorm2: (M, E) bf16 -> (M, E) bf16."""
    M, E = x.shape
    F = w1.shape[1]
    tm = _tile(S, _TM, 8)
    tf = _tile(F, _TF, 128)
    const = lambda i, f: (0, 0)
    return pl.pallas_call(
        _ffn_add_ln_kernel,
        out_shape=jax.ShapeDtypeStruct((M, E), jnp.bfloat16),
        grid_spec=pltpu.PrefetchScalarGridSpec(
            num_scalar_prefetch=0, grid=(M // tm, F // tf),
            in_specs=[pl.BlockSpec((tm, E), lambda i, f: (i, 0)),
                      pl.BlockSpec((E, tf), lambda i, f: (0, f)),
                      pl.BlockSpec((1, tf), lambda i, f: (0, f)),
                      pl.BlockSpec((tf, E), lambda i, f: (f, 0)),
                      pl.BlockSpec((1, E), const),
                      pl.BlockSpec((1, E), const),
                      pl.BlockSpec((1, E), const)],
            out_specs=pl.BlockSpec((tm, E), lambda i, f: (i, 0)),
            scratch_shapes=[pltpu.VMEM((tm, E), jnp.float32)]),
        compiler_params=_cparams(("parallel", "arbitrary")),
    )(x, w1, b1, w2, b2, g, be)


def instance_norm(h3):
    """InstanceNorm2d (affine=False) over S, lane-dense (B, S, E) f32 output."""
    B, S, E = h3.shape
    te = _tile(E, 256, 128)
    return pl.pallas_call(
        _instance_norm_kernel,
        out_shape=jax.ShapeDtypeStruct((B, S, E), jnp.float32),
        grid_spec=pltpu.PrefetchScalarGridSpec(
            num_scalar_prefetch=0, grid=(B, E // te),
            in_specs=[pl.BlockSpec((1, S, te), lambda b, e: (b, 0, e))],
            out_specs=pl.BlockSpec((1, S, te), lambda b, e: (b, 0, e))),
        compiler_params=_cparams(("parallel", "parallel")),
    )(h3)


# ------------------------------------------------------------------ model

def init_params(key, in_channels, embed_dim, num_heads, num_layers, ff_dim):
    d = embed_dim // num_heads

    def nrm(k, shape, dtype=jnp.float32):
        return (0.02 * jax.random.normal(k, shape, dtype=jnp.float32)).astype(dtype)

    keys = jax.random.split(key, 2 + num_layers)
    params = {
        # Conv2d(in_channels, embed_dim, kernel_size=1) == pointwise matmul.
        'conv_w': nrm(keys[0], (in_channels, embed_dim), jnp.bfloat16),
        'conv_b': nrm(keys[1], (1, embed_dim)),
        'layers': [],
    }
    for li in range(num_layers):
        sub = jax.random.split(keys[2 + li], 6)
        params['layers'].append({
            # head-major fused Q/K/V projection (in_proj of nn.MultiheadAttention)
            'w_qkv': nrm(sub[0], (3, num_heads, embed_dim, d), jnp.bfloat16),
            'b_qkv': nrm(sub[1], (3, num_heads, 1, d)),
            # out_proj, split per head: out = sum_h a_h @ wo[h]
            'wo': nrm(sub[2], (num_heads, d, embed_dim), jnp.bfloat16),
            'bo': jnp.zeros((1, embed_dim), jnp.float32),
            'w1': nrm(sub[3], (embed_dim, ff_dim), jnp.bfloat16),
            'b1': jnp.zeros((1, ff_dim), jnp.float32),
            'w2': nrm(sub[4], (ff_dim, embed_dim), jnp.bfloat16),
            'b2': jnp.zeros((1, embed_dim), jnp.float32),
            'g1': jnp.ones((1, embed_dim), jnp.float32),
            'be1': jnp.zeros((1, embed_dim), jnp.float32),
            'g2': jnp.ones((1, embed_dim), jnp.float32),
            'be2': jnp.zeros((1, embed_dim), jnp.float32),
        })
    return params


def encoder_layer(h, p, B, S):
    """One post-norm nn.TransformerEncoderLayer (activation=relu, eval mode)."""
    qkv = qkv_projection(h, p['w_qkv'], p['b_qkv'], B, S)    # (3, B, H, S, d) bf16
    a = attention(qkv, B, S)                                 # (B, H, S, d) bf16
    # src = norm1(src + self_attn(src))   (out-proj fused as an H-reduction)
    h = proj_add_layernorm(a, h, p['wo'], p['bo'], p['g1'], p['be1'], B, S)
    # src = norm2(src + linear2(relu(linear1(src))))   (F-tiled, fused)
    h = ffn_add_layernorm(h, p['w1'], p['b1'], p['w2'], p['b2'],
                          p['g2'], p['be2'], S)
    return h


def transformer_bridge_forward(x, params, num_heads):
    B, C, Hh, Ww = x.shape
    E = params['conv_w'].shape[1]
    S = Hh * Ww

    h = conv1x1(x, params['conv_w'], params['conv_b'])       # (B, S, E) bf16
    h = h.reshape(B * S, E)                                  # free reshape

    for layer_params in params['layers']:
        h = encoder_layer(h, layer_params, B, S)

    y = instance_norm(h.reshape(B, S, E))                    # (B, S, E) f32
    # Single XLA transpose to NCHW keeps the Pallas output store lane-dense (E).
    return jnp.transpose(y, (0, 2, 1)).reshape(B, E, Hh, Ww)


# ------------------------------------------------------------------ main

if __name__ == "__main__":
    B, C, Hh, Ww = 2, 4, 8, 8
    EMBED_DIM, NUM_HEADS, NUM_LAYERS, FF_DIM = 32, 4, 2, 64

    key = jax.random.PRNGKey(0)
    k_x, k_p = jax.random.split(key)
    x = jax.random.normal(k_x, (B, C, Hh, Ww), dtype=jnp.float32)
    params = init_params(k_p, C, EMBED_DIM, NUM_HEADS, NUM_LAYERS, FF_DIM)

    out = transformer_bridge_forward(x, params, NUM_HEADS)
    out = jax.block_until_ready(out)
    assert out.shape == (B, EMBED_DIM, Hh, Ww), out.shape
    assert bool(jnp.isfinite(out).all()), "non-finite output"
    print("KERNEL_OK")
</pallas_src>

<mosaic_0001>
module attributes {stable_mosaic.version = 11 : i64} {
  func.func @_conv1x1_kernel(%arg0: i32, %arg1: i32, %arg2: memref<1x4x64xf32, #tpu.memory_space<vmem>>, %arg3: memref<4x32xbf16, #tpu.memory_space<vmem>>, %arg4: memref<1x32xf32, #tpu.memory_space<vmem>>, %arg5: memref<1x64x32xbf16, #tpu.memory_space<vmem>>) attributes {dimension_semantics = [#tpu.dimension_semantics<parallel>, #tpu.dimension_semantics<parallel>], iteration_bounds = array<i64: 2, 1>, scalar_prefetch = 0 : i64, scratch_operands = 0 : i64, tpu.core_type = #tpu.core_type<tc>, window_params = [{transform_indices = @transform_0, window_bounds = array<i64: 1, 4, 64>}, {pipeline_mode = #tpu.pipeline_mode<synchronous>, transform_indices = @transform_1, window_bounds = array<i64: 4, 32>}, {pipeline_mode = #tpu.pipeline_mode<synchronous>, transform_indices = @transform_2, window_bounds = array<i64: 1, 32>}, {transform_indices = @transform_3, window_bounds = array<i64: 1, 64, 32>}]} {
    %c0 = arith.constant 0 : index
    %c0_0 = arith.constant 0 : index
    %c0_1 = arith.constant 0 : index
    %0 = vector.load %arg2[%c0, %c0_0, %c0_1] : memref<1x4x64xf32, #tpu.memory_space<vmem>>, vector<1x4x64xf32>
    %1 = vector.shape_cast %0 : vector<1x4x64xf32> to vector<4x64xf32>
    %2 = arith.truncf %1 : vector<4x64xf32> to vector<4x64xbf16>
    %c0_2 = arith.constant 0 : index
    %c0_3 = arith.constant 0 : index
    %3 = vector.load %arg3[%c0_2, %c0_3] : memref<4x32xbf16, #tpu.memory_space<vmem>>, vector<4x32xbf16>
    %cst = arith.constant dense<0.000000e+00> : vector<64x32xf32>
    %4 = tpu.matmul %2, %3, %cst {dimension_numbers = #tpu.dot_dimension_numbers<[0], [0], [1], [1], [0, 1, 1, 1], [], []>} : vector<4x64xbf16>, vector<4x32xbf16>, vector<64x32xf32> -> vector<64x32xf32>
    %c0_4 = arith.constant 0 : index
    %c0_5 = arith.constant 0 : index
    %5 = vector.load %arg4[%c0_4, %c0_5] : memref<1x32xf32, #tpu.memory_space<vmem>>, vector<1x32xf32>
    %6 = vector.broadcast %5 : vector<1x32xf32> to vector<64x32xf32>
    %7 = arith.addf %4, %6 : vector<64x32xf32>
    %8 = arith.truncf %7 : vector<64x32xf32> to vector<64x32xbf16>
    %c0_6 = arith.constant 0 : index
    %c0_7 = arith.constant 0 : index
    %c0_8 = arith.constant 0 : index
    %9 = vector.load %arg5[%c0_6, %c0_7, %c0_8] : memref<1x64x32xbf16, #tpu.memory_space<vmem>>, vector<1x64x32xbf16>
    %10 = vector.shape_cast %9 : vector<1x64x32xbf16> to vector<64x32xbf16>
    %11 = vector.shape_cast %8 : vector<64x32xbf16> to vector<1x64x32xbf16>
    tpu.vector_store %arg5[%c0_6, %c0_7, %c0_8], %11 {strides = array<i32>} : memref<1x64x32xbf16, #tpu.memory_space<vmem>>, vector<1x64x32xbf16>,
    return
  }
  func.func @transform_0(%arg0: i32, %arg1: i32) -> (i32, i32, i32) {
    %c0_i32 = arith.constant 0 : i32
    %c0_i32_0 = arith.constant 0 : i32
    return %arg0, %c0_i32, %arg1 : i32, i32, i32
  }
  func.func @transform_1(%arg0: i32, %arg1: i32) -> (i32, i32) {
    %c0_i32 = arith.constant 0 : i32
    %c0_i32_0 = arith.constant 0 : i32
    %c0_i32_1 = arith.constant 0 : i32
    return %c0_i32, %c0_i32_0 : i32, i32
  }
  func.func @transform_2(%arg0: i32, %arg1: i32) -> (i32, i32) {
    %c0_i32 = arith.constant 0 : i32
    %c0_i32_0 = arith.constant 0 : i32
    %c0_i32_1 = arith.constant 0 : i32
    return %c0_i32, %c0_i32_0 : i32, i32
  }
  func.func @transform_3(%arg0: i32, %arg1: i32) -> (i32, i32, i32) {
    %c0_i32 = arith.constant 0 : i32
    %c0_i32_0 = arith.constant 0 : i32
    return %arg0, %arg1, %c0_i32 : i32, i32, i32
  }
}

</mosaic_0001>

<llo_original>
// kernel: tpu_custom_call.1
$region0: #{tpu_custom_call.1}
  #allocation0 [shape = 'u32[]', space=smem, size = 0x4, offset = 0x4, fixed_abs, tag = 'smem constant byte address 0x4 - core index']
  #allocation1 [shape = 'u32[144,128]{1,0:T(1,128)}', space=vmem, size = 0x12000, scoped, tag = 'internal scratch']
  %s0 = inlined_call_operand.hbm [shape: f32[2,4,64], index: 0, kind: input, shape index: {}]
  %s1 = inlined_call_operand.vmem [shape: bf16[4,32], index: 1, kind: input, shape index: {}]
  %s2 = inlined_call_operand.vmem [shape: f32[1,32], index: 2, kind: input, shape index: {}]
  %s3 = inlined_call_operand.vmem [shape: bf16[2,64,32], index: 3, kind: output, shape index: {}]
  %s4 = sld [smem:[#allocation0]]
  $region49: #{tpu_custom_call.1} parent=0
    _
  %s6 = ssub.s32 1, %s4
  %s7 = scalar_select 0, %s6, %s4
  $region1: #{tpu_custom_call.1} parent=0
    #allocation2 [shape = 'u8[4096]{0}', space=vmem, size = 0x1000, scoped, tag = 'input window, operand 0']
    #allocation3 [shape = 's32[2]{0}', space=sflag, size = 0x8, scoped, tag = 'scoped memory for tpu_custom_call.1']
    %8 = vsyncpa [#allocation3], 0
    %s9 = scalar_lea.sflag [#allocation3], 1
    %10 = vsyncpa %s9, 0
    loop: start=0, step=1, limit=4
    $region2: #{tpu_custom_call.1} parent=1 // loop_pre_header
      _
    $region3: #{tpu_custom_call.1} parent=1 // loop_header
      %s12 = sphi 0, %s16
      %p13 = scmp.ge.s32.totalorder %s12, 4
      %s19 = sphi 0, %s31
      %s20 = sphi 0, %s27
      %s21 = sphi 0, %s19
      %s22 = sphi 0, %s20
      %s23 = sphi 0, %s21
      %s24 = sphi 0, %s22
      %s36 = sphi 0, %s38
      %s39 = sphi 0, %s36
      %s40 = sphi 0, %s39
      %s56 = sphi 0, %s40
      %s60 = sphi 0, %s60
      %s62 = sphi 0, %s60
      %s63 = sphi 0, %s62
      %s77 = sphi 0, %s63
      %s81 = sphi 0, %s81
      %s83 = sphi 0, %s81
      %s84 = sphi 0, %s83
      %s98 = sphi 0, %s84
      %s106 = sphi 0, %s108
      %s109 = sphi 0, %s106
      %s110 = sphi 0, %s109
      %s126 = sphi 0, %s110
    $region4: #{tpu_custom_call.1} parent=1 // loop_header_branch
      %15 = sbr.rel (%p13) target = $region8
    $region5: #{tpu_custom_call.1} parent=1 // loop_body
      %s17 = ssub.s32 %s12, 1
      %s18 = ssub.s32 %s12, 2
      %s25 = sadd.s32 1, %s20
      %p26 = scmp.ge.s32.totalorder %s25, 1
      %s27 = scalar_select %p26, 0, %s25
      %s28 = sadd.s32 1, %s19
      %s29 = scalar_select %p26, %s28, %s19
      %p30 = scmp.ge.s32.totalorder %s29, 2
      %s31 = scalar_select %p30, 0, %s29
      %s32 = ssub.s32 %s19, %s31
      %s33 = ssub.s32 %s20, %s27
      %s34 = sor.u32 %s32, %s33
      %p35 = scmp.eq.s32.totalorder %s34, 0
      %s37 = sadd.s32 %s36, 1
      %s38 = scalar_select %p35, %s36, %s37
      %p41 = pneg %p35
      %p42 = scmp.eq.s32.totalorder %s12, 1
      %p43 = por %p41, %p42
      %p44 = scmp.ne.s32.totalorder %s36, %s39
      %p45 = scmp.eq.s32.totalorder %s12, 0
      %p46 = por %p44, %p45
      %p47 = scmp.ne.s32.totalorder %s36, %s39
      %p48 = scmp.eq.s32.totalorder %s17, 1
      %p49 = por %p47, %p48
      %p50 = scmp.ne.s32.totalorder %s39, %s40
      %p51 = scmp.eq.s32.totalorder %s17, 0
      %p52 = por %p50, %p51
      %p53 = scmp.ne.s32.totalorder %s39, %s40
      %p54 = scmp.eq.s32.totalorder %s18, 1
      %p55 = por %p53, %p54
      %p57 = scmp.ne.s32.totalorder %s40, %s56
      %p58 = scmp.eq.s32.totalorder %s18, 0
      %p59 = por %p57, %p58
      %s61 = sadd.s32 %s60, 1
      %p64 = scmp.eq.s32.totalorder %s12, 1
      %p65 = scmp.ne.s32.totalorder %s60, %s62
      %p66 = scmp.eq.s32.totalorder %s12, 0
      %p67 = por %p65, %p66
      %p68 = scmp.ne.s32.totalorder %s60, %s62
      %p69 = scmp.eq.s32.totalorder %s17, 1
      %p70 = por %p68, %p69
      %p71 = scmp.ne.s32.totalorder %s62, %s63
      %p72 = scmp.eq.s32.totalorder %s17, 0
      %p73 = por %p71, %p72
      %p74 = scmp.ne.s32.totalorder %s62, %s63
      %p75 = scmp.eq.s32.totalorder %s18, 1
      %p76 = por %p74, %p75
      %p78 = scmp.ne.s32.totalorder %s63, %s77
      %p79 = scmp.eq.s32.totalorder %s18, 0
      %p80 = por %p78, %p79
      %s82 = sadd.s32 %s81, 1
      %p85 = scmp.eq.s32.totalorder %s12, 1
      %p86 = scmp.ne.s32.totalorder %s81, %s83
      %p87 = scmp.eq.s32.totalorder %s12, 0
      %p88 = por %p86, %p87
      %p89 = scmp.ne.s32.totalorder %s81, %s83
      %p90 = scmp.eq.s32.totalorder %s17, 1
      %p91 = por %p89, %p90
      %p92 = scmp.ne.s32.totalorder %s83, %s84
      %p93 = scmp.eq.s32.totalorder %s17, 0
      %p94 = por %p92, %p93
      %p95 = scmp.ne.s32.totalorder %s83, %s84
      %p96 = scmp.eq.s32.totalorder %s18, 1
      %p97 = por %p95, %p96
      %p99 = scmp.ne.s32.totalorder %s84, %s98
      %p100 = scmp.eq.s32.totalorder %s18, 0
      %p101 = por %p99, %p100
      %s102 = ssub.s32 %s19, %s31
      %s103 = ssub.s32 %s20, %s27
      %s104 = sor.u32 %s102, %s103
      %p105 = scmp.eq.s32.totalorder %s104, 0
      %s107 = sadd.s32 %s106, 1
      %s108 = scalar_select %p105, %s106, %s107
      %p111 = pneg %p105
      %p112 = scmp.eq.s32.totalorder %s12, 1
      %p113 = por %p111, %p112
      %p114 = scmp.ne.s32.totalorder %s106, %s109
      %p115 = scmp.eq.s32.totalorder %s12, 0
      %p116 = por %p114, %p115
      %p117 = scmp.ne.s32.totalorder %s106, %s109
      %p118 = scmp.eq.s32.totalorder %s17, 1
      %p119 = por %p117, %p118
      %p120 = scmp.ne.s32.totalorder %s109, %s110
      %p121 = scmp.eq.s32.totalorder %s17, 0
      %p122 = por %p120, %p121
      %p123 = scmp.ne.s32.totalorder %s109, %s110
      %p124 = scmp.eq.s32.totalorder %s18, 1
      %p125 = por %p123, %p124
      %p127 = scmp.ne.s32.totalorder %s110, %s126
      %p128 = scmp.eq.s32.totalorder %s18, 0
      %p129 = por %p127, %p128
      %p130 = scmp.le.s32.totalorder 1, %s12
      %p131 = scmp.lt.s32.totalorder %s12, 3
      %p132 = pnand %p130, %p131
      %p133 = pneg %p132
      // Predicated region
      $region9: #{tpu_custom_call.1} parent=5 // pred_check
        _
      $region10: #{tpu_custom_call.1} parent=5 // pred_check_branch
        %135 = sbr.rel (%p132) target = $region12
      $region11: #{tpu_custom_call.1} parent=5 // pred_region
        %s136 = ssub.s32 %s12, 1
        // Predicated region
        $region13: #{tpu_custom_call.1} parent=11 // pred_check
          %p137 = pneg %p73
        $region14: #{tpu_custom_call.1} parent=11 // pred_check_branch
          %139 = sbr.rel (%p137) target = $region16
        $region15: #{tpu_custom_call.1} parent=11 // pred_region
          _
        $region16: #{tpu_custom_call.1} parent=11 // pred_fallthru
          _
        // Predicated region
        $region17: #{tpu_custom_call.1} parent=11 // pred_check
          %p140 = pneg %p94
        $region18: #{tpu_custom_call.1} parent=11 // pred_check_branch
          %142 = sbr.rel (%p140) target = $region20
        $region19: #{tpu_custom_call.1} parent=11 // pred_region
          _
        $region20: #{tpu_custom_call.1} parent=11 // pred_fallthru
          _
      $region12: #{tpu_custom_call.1} parent=5 // pred_fallthru
        _
      %p143 = scmp.lt.s32.totalorder %s12, 2
      // Predicated region
      $region21: #{tpu_custom_call.1} parent=5 // pred_check
        %p144 = pneg %p143
      $region22: #{tpu_custom_call.1} parent=5 // pred_check_branch
        %146 = sbr.rel (%p144) target = $region24
      $region23: #{tpu_custom_call.1} parent=5 // pred_region
        // Predicated region
        $region25: #{tpu_custom_call.1} parent=23 // pred_check
          %p147 = pneg %p46
        $region26: #{tpu_custom_call.1} parent=23 // pred_check_branch
          %149 = sbr.rel (%p147) target = $region28
        $region27: #{tpu_custom_call.1} parent=23 // pred_region
          %s150 = sand.u32 %s36, 1
          %s151 = scalar_lea.sflag [#allocation3], %s150
          %s152 = sand.u32 %s36, 1
          %s153 = smul.addr %s152, 4
          %s154 = scalar_lea.vmem [#allocation2], %s153
          %s156 = ssub.s32 64, 64
          %157 = vsyncadd %s151, %s156
          %s158 = sadd.s32 %s20, %s19
          %s159 = smul.addr %s158, 64
          %s160 = scalar_lea.hbm %s0, %s159
          %s162 = sshll.u32 %s154, 4
          %s163 = int_to_ptr.vmem [resolvable:$true] %s162
          %165 = dma.hbm_to_vmem [thread:$0]  %s160, 64, %s163, %s151
        $region28: #{tpu_custom_call.1} parent=23 // pred_fallthru
          _
      $region24: #{tpu_custom_call.1} parent=5 // pred_fallthru
        _
      %p166 = scmp.le.s32.totalorder 1, %s12
      %p167 = scmp.lt.s32.totalorder %s12, 3
      %p168 = pnand %p166, %p167
      %p169 = pneg %p168
      // Predicated region
      $region29: #{tpu_custom_call.1} parent=5 // pred_check
        _
      $region30: #{tpu_custom_call.1} parent=5 // pred_check_branch
        %171 = sbr.rel (%p168) target = $region32
      $region31: #{tpu_custom_call.1} parent=5 // pred_region
        %s172 = ssub.s32 %s12, 1
        %s173 = sand.u32 %s39, 1
        %s174 = scalar_lea.sflag [#allocation3], %s173
        %s175 = sand.u32 %s39, 1
        %s176 = smul.addr %s175, 4
        %s177 = scalar_lea.vmem [#allocation2], %s176
        // Predicated region
        $region33: #{tpu_custom_call.1} parent=31 // pred_check
          %p178 = pneg %p52
        $region34: #{tpu_custom_call.1} parent=31 // pred_check_branch
          %180 = sbr.rel (%p178) target = $region36
        $region35: #{tpu_custom_call.1} parent=31 // pred_region
          %181 = dma.done %s174, 64
        $region36: #{tpu_custom_call.1} parent=31 // pred_fallthru
          _
        %s182 = sand.u32 %s39, 1
        %s183 = scalar_lea.sflag [#allocation3], %s182
        %s184 = sand.u32 %s39, 1
        %s185 = smul.addr %s184, 4
        %s186 = scalar_lea.vmem [#allocation2], %s185
        %p187 = pneg %p52
        %p188 = pneg %p49
        %p189 = pneg %p73
        %p190 = pneg %p70
        %p191 = pneg %p94
        %p192 = pneg %p91
        %p193 = pneg %p122
        %p194 = pneg %p119
        %s195 = smul.u32 8, %s22
        %p196 = scmp.lt.s32.totalorder %s21, 1
        %s197 = scalar_select %p196, %s21, 1
        %p198 = scmp.lt.s32.totalorder %s195, 7
        %s199 = scalar_select %p198, %s195, 7
        %s200 = smul.addr %s197, 8
        %s201 = sadd.s32 %s199, %s200
        %s202 = smul.addr %s201, 4
        %s203 = scalar_lea.vmem %s3, %s202
        %s204 = smul.u32 8, %s22
        %p205 = scmp.lt.s32.totalorder %s21, 1
        %s206 = scalar_select %p205, %s21, 1
        %p207 = scmp.lt.s32.totalorder %s204, 7
        %s208 = scalar_select %p207, %s204, 7
        %s209 = smul.addr %s206, 8
        %s210 = sadd.s32 %s208, %s209
        %s211 = smul.addr %s210, 4
        %s212 = scalar_lea.vmem %s3, %s211
        %s213 = smul.u32 8, %s22
        %v215 = vld [vmem:[%s177] sm:$0xf]
        %v216 = vpack.c.bf16 %v215, %v215
        %v217 = vld [vmem:[%s1] sm:$0x3]
        %v218 = vld [vmem:[%s2] sm:$0x1]
        %v220 = vlaneseq
        %v221 = vshrl.u32 %v220, 7
        %v222 = vsub.s32 0, %v221
        %v223 = vrot.slane %v218, %v222
        %225 = vxpose.xlu0.c.b16.start [1/8] %v216, 128
        %226 = vxpose.xlu0.c.b16.cont [2/8] 0, 128
        %227 = vxpose.xlu0.c.b16.cont [3/8] 0, 128
        %228 = vxpose.xlu0.c.b16.cont [4/8] 0, 128
        %229 = vxpose.xlu0.c.b16.cont [5/8] 0, 128
        %230 = vxpose.xlu0.c.b16.cont [6/8] 0, 128
        %231 = vxpose.xlu0.c.b16.cont [7/8] 0, 128
        %232 = vxpose.xlu0.c.b16.end [8/8] 0, 128
        %v233 = vpop.trf.xlu0
        %v234 = vpop.trf.xlu0
        %v235 = vpop.trf.xlu0
        %v236 = vpop.trf.xlu0
        %v237 = vpop.trf.xlu0
        %v238 = vpop.trf.xlu0
        %v239 = vpop.trf.xlu0
        %v240 = vpop.trf.xlu0
        %vm241 = vcmask 31744
        %v243 = vsel %vm241, %v233, 0
        %v246 = vsel %vm241, %v234, 0
        %v249 = vsel %vm241, %v235, 0
        %v252 = vsel %vm241, %v236, 0
        %vm254 = vcmask 1041408
        %v256 = vsel %vm254, %v217, 0
        %258 = vmatprep.subr.bf16.mxu0 0
        %259 = vmatpush1.bf16.msra.mxu0 %v256
        %260 = vmatprep.subr.bf16.mxu0 0
        %261 = vmatpush1.bf16.msra.mxu0 0
        %262 = vmatprep.subr.bf16.mxu0 0
        %263 = vmatpush1.bf16.msra.mxu0 0
        %264 = vmatprep.subr.bf16.mxu0 0
        %265 = vmatpush1.bf16.msra.mxu0 0
        %266 = vmatprep.subr.bf16.mxu0 0
        %267 = vmatpush1.bf16.msra.mxu0 0
        %268 = vmatprep.subr.bf16.mxu0 0
        %269 = vmatpush1.bf16.msra.mxu0 0
        %270 = vmatprep.subr.bf16.mxu0 0
        %271 = vmatpush1.bf16.msra.mxu0 0
        %272 = vmatprep.subr.bf16.mxu0 0
        %273 = vmatpush1.bf16.msra.mxu0 0
        %274 = vmatprep.subr.bf16.mxu0 0
        %275 = vmatpush1.bf16.msra.mxu0 0
        %276 = vmatprep.subr.bf16.mxu0 0
        %277 = vmatpush1.bf16.msra.mxu0 0
        %278 = vmatprep.subr.bf16.mxu0 0
        %279 = vmatpush1.bf16.msra.mxu0 0
        %280 = vmatprep.subr.bf16.mxu0 0
        %281 = vmatpush1.bf16.msra.mxu0 0
        %282 = vmatprep.subr.bf16.mxu0 0
        %283 = vmatpush1.bf16.msra.mxu0 0
        %284 = vmatprep.subr.bf16.mxu0 0
        %285 = vmatpush1.bf16.msra.mxu0 0
        %286 = vmatprep.subr.bf16.mxu0 0
        %287 = vmatpush1.bf16.msra.mxu0 0
        %288 = vmatprep.subr.bf16.mxu0 0
        %289 = vmatpush1.bf16.msra.mxu0 0
        %290 = vmatprep.mubr.bf16.mxu0 0
        %291 = vmatmul.mubr.bf16.gmra.mrb[0].mxu0 %v243
        %v292 = vpop.f32.mrb[0].mxu0
        %v293 = vadd.f32 %v223, %v292
        %v294 = vpop.f32.mrb[0].mxu0
        %v295 = vpop.f32.mrb[0].mxu0
        %v296 = vadd.f32 %v223, %v295
        %v297 = vpop.f32.mrb[0].mxu0
        %298 = vmatprep.mubr.bf16.mxu0 0
        %299 = vmatmul.mubr.bf16.gmra.mrb[0].mxu0 %v246
        %v300 = vpop.f32.mrb[0].mxu0
        %v301 = vadd.f32 %v223, %v300
        %v302 = vpop.f32.mrb[0].mxu0
        %v303 = vpop.f32.mrb[0].mxu0
        %v304 = vadd.f32 %v223, %v303
        %v305 = vpop.f32.mrb[0].mxu0
        %306 = vmatprep.mubr.bf16.mxu0 0
        %307 = vmatmul.mubr.bf16.gmra.mrb[0].mxu0 %v249
        %v308 = vpop.f32.mrb[0].mxu0
        %v309 = vadd.f32 %v223, %v308
        %v310 = vpop.f32.mrb[0].mxu0
        %v311 = vpop.f32.mrb[0].mxu0
        %v312 = vadd.f32 %v223, %v311
        %v313 = vpop.f32.mrb[0].mxu0
        %314 = vmatprep.mubr.bf16.mxu0 0
        %315 = vmatmul.mubr.bf16.gmra.mrb[0].mxu0 %v252
        %v316 = vpop.f32.mrb[0].mxu0
        %v317 = vadd.f32 %v223, %v316
        %v318 = vpop.f32.mrb[0].mxu0
        %v319 = vpop.f32.mrb[0].mxu0
        %v320 = vadd.f32 %v223, %v319
        %v321 = vpop.f32.mrb[0].mxu0
        %322 = vdwg.mxu0
        %v323 = vpack.c.bf16 %v296, %v293
        %v324 = vpack.c.bf16 %v304, %v301
        %v325 = vpack.c.bf16 %v312, %v309
        %v326 = vpack.c.bf16 %v320, %v317
        %v331 = vunpack.c.l.b16 %v323
        %v332 = vunpack.c.h.b16 %v323
        %v333 = vunpack.c.l.b16 %v324
        %v334 = vunpack.c.h.b16 %v324
        %v335 = vunpack.c.l.b16 %v325
        %v336 = vunpack.c.h.b16 %v325
        %v337 = vunpack.c.l.b16 %v326
        %v338 = vunpack.c.h.b16 %v326
        %v339 = vpack.c.b16 %v331, %v331
        %v340 = vpack.c.b16 %v332, %v332
        %v341 = vpack.c.b16 %v333, %v333
        %v342 = vpack.c.b16 %v334, %v334
        %v343 = vpack.c.b16 %v335, %v335
        %v344 = vpack.c.b16 %v336, %v336
        %v345 = vpack.c.b16 %v337, %v337
        %v346 = vpack.c.b16 %v338, %v338
        %vm355 = vcmask 257024
        %356 = vst.msk [vmem:[%s212] sm:$0xf] %vm355, %v339
        %357 = vst.msk [vmem:[%s212 + $0x4] sm:$0xf] %vm355, %v340
        %358 = vst.msk [vmem:[%s212 + $0x8] sm:$0xf] %vm355, %v341
        %359 = vst.msk [vmem:[%s212 + $0xc] sm:$0xf] %vm355, %v342
        %360 = vst.msk [vmem:[%s212 + $0x10] sm:$0xf] %vm355, %v343
        %361 = vst.msk [vmem:[%s212 + $0x14] sm:$0xf] %vm355, %v344
        %362 = vst.msk [vmem:[%s212 + $0x18] sm:$0xf] %vm355, %v345
        %363 = vst.msk [vmem:[%s212 + $0x1c] sm:$0xf] %vm355, %v346
        %s364 = smul.u32 8, %s22
        %p365 = scmp.lt.s32.totalorder %s21, 1
        %s366 = scalar_select %p365, %s21, 1
        %p367 = scmp.lt.s32.totalorder %s364, 7
        %s368 = scalar_select %p367, %s364, 7
        %s369 = smul.addr %s366, 8
        %s370 = sadd.s32 %s368, %s369
        %s371 = smul.addr %s370, 4
        %s372 = scalar_lea.vmem %s3, %s371
        // Predicated region
        $region37: #{tpu_custom_call.1} parent=31 // pred_check
          %p373 = pneg %p119
        $region38: #{tpu_custom_call.1} parent=31 // pred_check_branch
          %375 = sbr.rel (%p373) target = $region40
        $region39: #{tpu_custom_call.1} parent=31 // pred_region
          %s376 = smul.u32 8, %s22
        $region40: #{tpu_custom_call.1} parent=31 // pred_fallthru
          _
      $region32: #{tpu_custom_call.1} parent=5 // pred_fallthru
        _
      %p377 = scmp.le.s32.totalorder 2, %s12
      // Predicated region
      $region41: #{tpu_custom_call.1} parent=5 // pred_check
        %p378 = pneg %p377
      $region42: #{tpu_custom_call.1} parent=5 // pred_check_branch
        %380 = sbr.rel (%p378) target = $region44
      $region43: #{tpu_custom_call.1} parent=5 // pred_region
        %s381 = ssub.s32 %s12, 2
        // Predicated region
        $region45: #{tpu_custom_call.1} parent=43 // pred_check
          %p382 = pneg %p125
        $region46: #{tpu_custom_call.1} parent=43 // pred_check_branch
          %384 = sbr.rel (%p382) target = $region48
        $region47: #{tpu_custom_call.1} parent=43 // pred_region
          %s385 = smul.u32 8, %s24
          %p386 = scmp.lt.s32.totalorder %s23, 1
          %s387 = scalar_select %p386, %s23, 1
          %p388 = scmp.lt.s32.totalorder %s385, 7
          %s389 = scalar_select %p388, %s385, 7
          %s390 = smul.addr %s387, 8
          %s391 = sadd.s32 %s389, %s390
          %s392 = smul.addr %s391, 4
          %s393 = scalar_lea.vmem %s3, %s392
        $region48: #{tpu_custom_call.1} parent=43 // pred_fallthru
          _
      $region44: #{tpu_custom_call.1} parent=5 // pred_fallthru
        _
    $region6: #{tpu_custom_call.1} parent=1 // loop_footer
      %s16 = sadd.s32 1, %s12
    $region7: #{tpu_custom_call.1} parent=1 // loop_footer_branch
      %11 = sbr.rel target = $region3
    $region8: #{tpu_custom_call.1} parent=1 // loop_exit
      _
    %394 = vsyncpa [#allocation3], 1
    %s395 = scalar_lea.sflag [#allocation3], 1
    %396 = vsyncpa %s395, 1

</llo_original>
